<compile_context>
chip_gen: v7x
topology: tpu7x:2x2x1
jax: 0.10.0
libtpu: 0.0.40
codegen_flags: <defaults>
</compile_context>

<pallas_src>
import functools

import jax
import jax.numpy as jnp
import numpy as np
from jax.experimental import pallas as pl
from jax.experimental.pallas import tpu as pltpu

INF = 1e12  # plays the role of the module-level INF global in the reference code


def _egp_kernel(x_ref, w1_ref, b1_ref, w2_ref, b2_ref, sin_ref, cos_ref,
                mask_ref, out_ref, qk_scr, bias_scr, *, heads, head_size, head_tile):
    f32 = jnp.float32
    t = pl.program_id(1)          # head-tile index (innermost, "arbitrary")
    D = head_size
    Dh = D // 2

    @pl.when(t == 0)
    def _():
        x = x_ref[0]                                                        # (L, H)

        # fused dense1: one (L,H) x (H,2D) matmul, columns = [q1 | q2 | k1 | k2]
        h = jnp.dot(x, w1_ref[...], preferred_element_type=f32) + b1_ref[...]

        # RoPE on the de-interleaved pair halves; fold 1/sqrt(D) into q (LxD work)
        sin = sin_ref[...]
        cos = cos_ref[...]
        q1, q2 = h[:, 0:Dh], h[:, Dh:D]
        k1, k2 = h[:, D:D + Dh], h[:, D + Dh:2 * D]
        scale = 1.0 / (head_size ** 0.5)
        q_r = jnp.concatenate([q1 * cos - q2 * sin, q1 * sin + q2 * cos],
                              axis=-1) * scale                              # (L, D)
        k_r = jnp.concatenate([k1 * cos - k2 * sin, k1 * sin + k2 * cos],
                              axis=-1)                                      # (L, D)

        # single qk matmul, contraction K = head_size (scale already applied)
        qk = jnp.dot(q_r, k_r.T, preferred_element_type=f32)               # (L, L)

        # mask penalties hoisted once onto the shared (L, L) tile
        am = mask_ref[0]                                                   # (1, L)
        pad = 1.0 - am * am.T                                              # (L, L)
        L = qk.shape[0]
        row = jax.lax.broadcasted_iota(jnp.int32, (L, L), 0)
        col = jax.lax.broadcasted_iota(jnp.int32, (L, L), 1)
        tril = (row > col).astype(f32)
        qk_scr[...] = qk - (pad + tril) * INF

        # fused dense2 on the pre-RoPE features; output columns = [q-bias | k-bias]
        bias = (jnp.dot(h, w2_ref[...], preferred_element_type=f32)
                + b2_ref[...]) * 0.5                                        # (L, 2*heads)
        bias_scr[...] = bias.T                                             # (2*heads, L)

    # per-head-tile work: only the (HT, L, L) broadcast-add + store
    h0 = t * head_tile
    bq = bias_scr[pl.ds(h0, head_tile), :]                                 # (HT, L) -> col bias
    bk = bias_scr[pl.ds(heads + h0, head_tile), :]                         # (HT, L) -> row bias
    out_ref[0] = (qk_scr[...] + bq[:, None, :] + bk[:, :, None]).astype(out_ref.dtype)


def _pick_head_tile(heads, max_tile=4):
    for ht in range(min(heads, max_tile), 0, -1):
        if heads % ht == 0:
            return ht
    return 1


def efficient_global_pointer(x, W1, b1, W2, b2, *, heads, head_size,
                             max_length=512, attention_mask=None, head_tile=None):
    """x: (B, L, hidden) float32.  W1: (2*head_size, hidden), W2: (2*heads, 2*head_size)."""
    B, L, H = x.shape
    D = head_size
    Dh = D // 2
    if head_tile is None:
        head_tile = _pick_head_tile(heads)
    assert heads % head_tile == 0
    n_tiles = heads // head_tile

    x = x.astype(jnp.float32)

    # --- de-interleave dense1 columns into one [q1 | q2 | k1 | k2] weight matrix ---
    # dense1 output col c: c%2==0 -> q, c%2==1 -> k; within q/k, even pair idx -> half1.
    w1 = jnp.concatenate([W1[0::4], W1[2::4], W1[1::4], W1[3::4]], axis=0)     # (2D, H)
    w1 = jnp.transpose(w1).astype(jnp.float32)                                 # (H, 2D)
    b1r = jnp.concatenate([b1[0::4], b1[2::4], b1[1::4], b1[3::4]])[None, :].astype(jnp.float32)

    # --- dense2: rows follow the same de-interleave; columns permuted so the first
    # `heads` are the q-bias (even out idx) and the rest the k-bias ---
    perm_out = np.concatenate([np.arange(0, 2 * heads, 2), np.arange(1, 2 * heads, 2)])
    W2p = W2[perm_out]                                                         # (2*heads, 2D)
    w2 = jnp.concatenate([W2p[:, 0::4], W2p[:, 2::4], W2p[:, 1::4], W2p[:, 3::4]], axis=1)
    w2 = jnp.transpose(w2).astype(jnp.float32)                                 # (2D, 2*heads)
    b2p = b2[perm_out][None, :].astype(jnp.float32)                            # (1, 2*heads)

    # --- rotary tables (same construction as RotaryPositionEmbedding) ---
    inv_freq = 1.0 / (10000.0 ** (jnp.arange(0, D, 2, dtype=jnp.float32) / D))
    tpos = jnp.arange(max_length, dtype=jnp.float32)
    freqs = tpos[:, None] * inv_freq[None, :]
    sin = jnp.sin(freqs)[:L]                                                   # (L, Dh)
    cos = jnp.cos(freqs)[:L]

    if attention_mask is None:
        attention_mask = jnp.ones((B, L), jnp.float32)
    maskr = attention_mask.astype(jnp.float32).reshape(B, 1, L)

    kernel = functools.partial(_egp_kernel, heads=heads, head_size=head_size,
                               head_tile=head_tile)
    out = pl.pallas_call(
        kernel,
        out_shape=jax.ShapeDtypeStruct((B, heads, L, L), jnp.float32),
        grid_spec=pltpu.PrefetchScalarGridSpec(
            num_scalar_prefetch=0,
            grid=(B, n_tiles),
            in_specs=[
                pl.BlockSpec((1, L, H), lambda b, t: (b, 0, 0)),            # x
                pl.BlockSpec((H, 2 * D), lambda b, t: (0, 0)),              # dense1 weights
                pl.BlockSpec((1, 2 * D), lambda b, t: (0, 0)),              # dense1 bias
                pl.BlockSpec((2 * D, 2 * heads), lambda b, t: (0, 0)),      # dense2 weights
                pl.BlockSpec((1, 2 * heads), lambda b, t: (0, 0)),          # dense2 bias
                pl.BlockSpec((L, Dh), lambda b, t: (0, 0)),                 # sin
                pl.BlockSpec((L, Dh), lambda b, t: (0, 0)),                 # cos
                pl.BlockSpec((1, 1, L), lambda b, t: (b, 0, 0)),            # attention mask
            ],
            out_specs=pl.BlockSpec((1, head_tile, L, L), lambda b, t: (b, t, 0, 0)),
            scratch_shapes=[
                pltpu.VMEM((L, L), jnp.float32),           # masked qk, cached per batch
                pltpu.VMEM((2 * heads, L), jnp.float32),   # transposed bias, cached per batch
            ],
        ),
        compiler_params=pltpu.CompilerParams(
            dimension_semantics=("parallel", "arbitrary"),
            vmem_limit_bytes=48 * 1024 * 1024,
        ),
    )(x, w1, b1r, w2, b2p, sin, cos, maskr)
    return out


def _reference(x, W1, b1, W2, b2, *, heads, head_size, max_length, attention_mask=None):
    """Pure-jnp transcription of the PyTorch forward (for verification)."""
    B, L, _ = x.shape
    D = head_size
    h = x @ W1.T + b1                                          # (B, L, 2D)
    qw, kw = h[..., 0::2], h[..., 1::2]
    inv_freq = 1.0 / (10000.0 ** (jnp.arange(0, D, 2, dtype=jnp.float32) / D))
    t = jnp.arange(max_length, dtype=jnp.float32)
    freqs = t[:, None] * inv_freq[None, :]
    sin, cos = jnp.sin(freqs)[:L], jnp.cos(freqs)[:L]

    def rope(v):
        v1, v2 = v[..., 0::2], v[..., 1::2]
        out = jnp.stack([v1 * cos - v2 * sin, v1 * sin + v2 * cos], axis=-1)
        return out.reshape(v.shape)

    qw, kw = rope(qw), rope(kw)
    logits = jnp.einsum('bmd,bnd->bmn', qw, kw) / D ** 0.5
    bias = jnp.transpose(h @ W2.T + b2, (0, 2, 1)) / 2         # (B, 2*heads, L)
    logits = logits[:, None] + bias[:, 0::2, None] + bias[:, 1::2, :, None]
    if attention_mask is not None:
        am = attention_mask.astype(logits.dtype)
        attn = 1.0 - am[:, None, None, :] * am[:, None, :, None]
        logits = logits - attn * INF
    tril = jnp.tril(jnp.ones((L, L), jnp.float32), k=-1)
    logits = logits - tril * INF
    return logits


if __name__ == "__main__":
    B, L, hidden = 2, 16, 32
    heads, head_size, max_length = 8, 16, 64

    key = jax.random.PRNGKey(0)
    kx, kw1, kb1, kw2, kb2 = jax.random.split(key, 5)
    x = jax.random.normal(kx, (B, L, hidden), jnp.float32)
    W1 = jax.random.normal(kw1, (2 * head_size, hidden), jnp.float32) * 0.05
    b1 = jax.random.normal(kb1, (2 * head_size,), jnp.float32) * 0.05
    W2 = jax.random.normal(kw2, (2 * heads, 2 * head_size), jnp.float32) * 0.05
    b2 = jax.random.normal(kb2, (2 * heads,), jnp.float32) * 0.05

    # non-trivial padding mask: batch 0 fully valid, batch 1 has last 3 tokens padded
    attention_mask = jnp.concatenate(
        [jnp.ones((1, L), jnp.float32),
         jnp.concatenate([jnp.ones((1, L - 3)), jnp.zeros((1, 3))], axis=1)], axis=0)

    out = efficient_global_pointer(x, W1, b1, W2, b2, heads=heads,
                                   head_size=head_size, max_length=max_length,
                                   attention_mask=attention_mask)
    out = jax.block_until_ready(out)

    ref = _reference(x, W1, b1, W2, b2, heads=heads, head_size=head_size,
                     max_length=max_length, attention_mask=attention_mask)
    np.testing.assert_allclose(np.asarray(out), np.asarray(ref), rtol=1e-4, atol=1e-3)

    print("KERNEL_OK")
</pallas_src>

<mosaic_0001>
module attributes {stable_mosaic.version = 11 : i64} {
  func.func @_egp_kernel(%arg0: i32, %arg1: i32, %arg2: memref<1x16x32xf32, #tpu.memory_space<vmem>>, %arg3: memref<32x32xf32, #tpu.memory_space<vmem>>, %arg4: memref<1x32xf32, #tpu.memory_space<vmem>>, %arg5: memref<32x16xf32, #tpu.memory_space<vmem>>, %arg6: memref<1x16xf32, #tpu.memory_space<vmem>>, %arg7: memref<16x8xf32, #tpu.memory_space<vmem>>, %arg8: memref<16x8xf32, #tpu.memory_space<vmem>>, %arg9: memref<1x1x16xf32, #tpu.memory_space<vmem>>, %arg10: memref<1x4x16x16xf32, #tpu.memory_space<vmem>>, %arg11: memref<16x16xf32, #tpu.memory_space<vmem>>, %arg12: memref<16x16xf32, #tpu.memory_space<vmem>>) attributes {dimension_semantics = [#tpu.dimension_semantics<parallel>, #tpu.dimension_semantics<arbitrary>], iteration_bounds = array<i64: 2, 2>, scalar_prefetch = 0 : i64, scratch_operands = 2 : i64, tpu.core_type = #tpu.core_type<tc>, window_params = [{transform_indices = @transform_0, window_bounds = array<i64: 1, 16, 32>}, {pipeline_mode = #tpu.pipeline_mode<synchronous>, transform_indices = @transform_1, window_bounds = array<i64: 32, 32>}, {pipeline_mode = #tpu.pipeline_mode<synchronous>, transform_indices = @transform_2, window_bounds = array<i64: 1, 32>}, {pipeline_mode = #tpu.pipeline_mode<synchronous>, transform_indices = @transform_3, window_bounds = array<i64: 32, 16>}, {pipeline_mode = #tpu.pipeline_mode<synchronous>, transform_indices = @transform_4, window_bounds = array<i64: 1, 16>}, {pipeline_mode = #tpu.pipeline_mode<synchronous>, transform_indices = @transform_5, window_bounds = array<i64: 16, 8>}, {pipeline_mode = #tpu.pipeline_mode<synchronous>, transform_indices = @transform_6, window_bounds = array<i64: 16, 8>}, {transform_indices = @transform_7, window_bounds = array<i64: 1, 1, 16>}, {transform_indices = @transform_8, window_bounds = array<i64: 1, 4, 16, 16>}]} {
    %c0_i32 = arith.constant 0 : i32
    %0 = arith.cmpi eq, %arg1, %c0_i32 : i32
    %1 = arith.extui %0 : i1 to i32
    %c0_i32_0 = arith.constant 0 : i32
    %2 = arith.cmpi ne, %1, %c0_i32_0 : i32
    scf.if %2 {
      %c0_8 = arith.constant 0 : index
      %c0_9 = arith.constant 0 : index
      %c0_10 = arith.constant 0 : index
      %21 = vector.load %arg2[%c0_8, %c0_9, %c0_10] : memref<1x16x32xf32, #tpu.memory_space<vmem>>, vector<1x16x32xf32>
      %22 = vector.shape_cast %21 : vector<1x16x32xf32> to vector<16x32xf32>
      %c0_11 = arith.constant 0 : index
      %c0_12 = arith.constant 0 : index
      %23 = vector.load %arg3[%c0_11, %c0_12] : memref<32x32xf32, #tpu.memory_space<vmem>>, vector<32x32xf32>
      %cst = arith.constant dense<0.000000e+00> : vector<16x32xf32>
      %24 = tpu.matmul %22, %23, %cst {dimension_numbers = #tpu.dot_dimension_numbers<[1], [0], [0], [1], [0, 0, 1, 1], [], []>} : vector<16x32xf32>, vector<32x32xf32>, vector<16x32xf32> -> vector<16x32xf32>
      %c0_13 = arith.constant 0 : index
      %c0_14 = arith.constant 0 : index
      %25 = vector.load %arg4[%c0_13, %c0_14] : memref<1x32xf32, #tpu.memory_space<vmem>>, vector<1x32xf32>
      %26 = vector.broadcast %25 : vector<1x32xf32> to vector<16x32xf32>
      %27 = arith.addf %24, %26 : vector<16x32xf32>
      %c0_15 = arith.constant 0 : index
      %c0_16 = arith.constant 0 : index
      %28 = vector.load %arg7[%c0_15, %c0_16] : memref<16x8xf32, #tpu.memory_space<vmem>>, vector<16x8xf32>
      %c0_17 = arith.constant 0 : index
      %c0_18 = arith.constant 0 : index
      %29 = vector.load %arg8[%c0_17, %c0_18] : memref<16x8xf32, #tpu.memory_space<vmem>>, vector<16x8xf32>
      %30 = vector.extract_strided_slice %27 {offsets = [0, 0], sizes = [16, 8], strides = [1, 1]} : vector<16x32xf32> to vector<16x8xf32>
      %31 = vector.extract_strided_slice %27 {offsets = [0, 8], sizes = [16, 8], strides = [1, 1]} : vector<16x32xf32> to vector<16x8xf32>
      %32 = vector.extract_strided_slice %27 {offsets = [0, 16], sizes = [16, 8], strides = [1, 1]} : vector<16x32xf32> to vector<16x8xf32>
      %33 = vector.extract_strided_slice %27 {offsets = [0, 24], sizes = [16, 8], strides = [1, 1]} : vector<16x32xf32> to vector<16x8xf32>
      %34 = arith.mulf %30, %29 : vector<16x8xf32>
      %35 = arith.mulf %31, %28 : vector<16x8xf32>
      %36 = arith.subf %34, %35 : vector<16x8xf32>
      %37 = arith.mulf %30, %28 : vector<16x8xf32>
      %38 = arith.mulf %31, %29 : vector<16x8xf32>
      %39 = arith.addf %37, %38 : vector<16x8xf32>
      %40 = tpu.concatenate %36, %39 in 1 : vector<16x8xf32>, vector<16x8xf32> -> vector<16x16xf32>
      %cst_19 = arith.constant 2.500000e-01 : f32
      %41 = vector.broadcast %cst_19 : f32 to vector<16x16xf32>
      %42 = arith.mulf %40, %41 : vector<16x16xf32>
      %43 = arith.mulf %32, %29 : vector<16x8xf32>
      %44 = arith.mulf %33, %28 : vector<16x8xf32>
      %45 = arith.subf %43, %44 : vector<16x8xf32>
      %46 = arith.mulf %32, %28 : vector<16x8xf32>
      %47 = arith.mulf %33, %29 : vector<16x8xf32>
      %48 = arith.addf %46, %47 : vector<16x8xf32>
      %49 = tpu.concatenate %45, %48 in 1 : vector<16x8xf32>, vector<16x8xf32> -> vector<16x16xf32>
      %50 = tpu.transpose %49, [1, 0] : vector<16x16xf32> -> vector<16x16xf32>
      %cst_20 = arith.constant dense<0.000000e+00> : vector<16x16xf32>
      %51 = tpu.matmul %42, %50, %cst_20 {dimension_numbers = #tpu.dot_dimension_numbers<[1], [0], [0], [1], [0, 0, 1, 1], [], []>} : vector<16x16xf32>, vector<16x16xf32>, vector<16x16xf32> -> vector<16x16xf32>
      %c0_21 = arith.constant 0 : index
      %c0_22 = arith.constant 0 : index
      %c0_23 = arith.constant 0 : index
      %52 = vector.load %arg9[%c0_21, %c0_22, %c0_23] : memref<1x1x16xf32, #tpu.memory_space<vmem>>, vector<1x1x16xf32>
      %53 = vector.shape_cast %52 : vector<1x1x16xf32> to vector<1x16xf32>
      %54 = tpu.transpose %53, [1, 0] : vector<1x16xf32> -> vector<16x1xf32>
      %55 = vector.broadcast %53 : vector<1x16xf32> to vector<16x16xf32>
      %56 = vector.broadcast %54 : vector<16x1xf32> to vector<16x16xf32>
      %57 = arith.mulf %55, %56 : vector<16x16xf32>
      %cst_24 = arith.constant 1.000000e+00 : f32
      %58 = vector.broadcast %cst_24 : f32 to vector<16x16xf32>
      %59 = arith.subf %58, %57 : vector<16x16xf32>
      %60 = tpu.iota {dimensions = array<i32: 0>} : vector<16x16xi32>
      %61 = tpu.iota {dimensions = array<i32: 1>} : vector<16x16xi32>
      %62 = arith.cmpi sgt, %60, %61 : vector<16x16xi32>
      %63 = arith.extui %62 : vector<16x16xi1> to vector<16x16xi32>
      %64 = arith.sitofp %63 : vector<16x16xi32> to vector<16x16xf32>
      %65 = arith.addf %59, %64 : vector<16x16xf32>
      %cst_25 = arith.constant 9.99999995E+11 : f32
      %66 = vector.broadcast %cst_25 : f32 to vector<16x16xf32>
      %67 = arith.mulf %65, %66 : vector<16x16xf32>
      %68 = arith.subf %51, %67 : vector<16x16xf32>
      %c0_26 = arith.constant 0 : index
      %c0_27 = arith.constant 0 : index
      %69 = vector.load %arg11[%c0_26, %c0_27] : memref<16x16xf32, #tpu.memory_space<vmem>>, vector<16x16xf32>
      tpu.vector_store %arg11[%c0_26, %c0_27], %68 {strides = array<i32>} : memref<16x16xf32, #tpu.memory_space<vmem>>, vector<16x16xf32>,
      %c0_28 = arith.constant 0 : index
      %c0_29 = arith.constant 0 : index
      %70 = vector.load %arg5[%c0_28, %c0_29] : memref<32x16xf32, #tpu.memory_space<vmem>>, vector<32x16xf32>
      %cst_30 = arith.constant dense<0.000000e+00> : vector<16x16xf32>
      %71 = tpu.matmul %27, %70, %cst_30 {dimension_numbers = #tpu.dot_dimension_numbers<[1], [0], [0], [1], [0, 0, 1, 1], [], []>} : vector<16x32xf32>, vector<32x16xf32>, vector<16x16xf32> -> vector<16x16xf32>
      %c0_31 = arith.constant 0 : index
      %c0_32 = arith.constant 0 : index
      %72 = vector.load %arg6[%c0_31, %c0_32] : memref<1x16xf32, #tpu.memory_space<vmem>>, vector<1x16xf32>
      %73 = vector.broadcast %72 : vector<1x16xf32> to vector<16x16xf32>
      %74 = arith.addf %71, %73 : vector<16x16xf32>
      %cst_33 = arith.constant 5.000000e-01 : f32
      %75 = vector.broadcast %cst_33 : f32 to vector<16x16xf32>
      %76 = arith.mulf %74, %75 : vector<16x16xf32>
      %77 = tpu.transpose %76, [1, 0] : vector<16x16xf32> -> vector<16x16xf32>
      %c0_34 = arith.constant 0 : index
      %c0_35 = arith.constant 0 : index
      %78 = vector.load %arg12[%c0_34, %c0_35] : memref<16x16xf32, #tpu.memory_space<vmem>>, vector<16x16xf32>
      tpu.vector_store %arg12[%c0_34, %c0_35], %77 {strides = array<i32>} : memref<16x16xf32, #tpu.memory_space<vmem>>, vector<16x16xf32>,
    } else {
    }
    %c4_i32 = arith.constant 4 : i32
    %3 = arith.muli %arg1, %c4_i32 : i32
    %4 = arith.index_cast %3 : i32 to index
    %c0 = arith.constant 0 : index
    %5 = vector.load %arg12[%4, %c0] : memref<16x16xf32, #tpu.memory_space<vmem>>, vector<4x16xf32>
    %c8_i32 = arith.constant 8 : i32
    %6 = arith.addi %c8_i32, %3 : i32
    %7 = arith.index_cast %6 : i32 to index
    %c0_1 = arith.constant 0 : index
    %8 = vector.load %arg12[%7, %c0_1] : memref<16x16xf32, #tpu.memory_space<vmem>>, vector<4x16xf32>
    %c0_2 = arith.constant 0 : index
    %c0_3 = arith.constant 0 : index
    %9 = vector.load %arg11[%c0_2, %c0_3] : memref<16x16xf32, #tpu.memory_space<vmem>>, vector<16x16xf32>
    %10 = vector.shape_cast %5 : vector<4x16xf32> to vector<4x1x16xf32>
    %11 = vector.shape_cast %9 : vector<16x16xf32> to vector<1x16x16xf32>
    %12 = vector.broadcast %11 : vector<1x16x16xf32> to vector<4x16x16xf32>
    %13 = vector.broadcast %10 : vector<4x1x16xf32> to vector<4x16x16xf32>
    %14 = arith.addf %12, %13 : vector<4x16x16xf32>
    %15 = vector.shape_cast %8 : vector<4x16xf32> to vector<4x16x1xf32>
    %16 = vector.broadcast %15 : vector<4x16x1xf32> to vector<4x16x16xf32>
    %17 = arith.addf %14, %16 : vector<4x16x16xf32>
    %c0_4 = arith.constant 0 : index
    %c0_5 = arith.constant 0 : index
    %c0_6 = arith.constant 0 : index
    %c0_7 = arith.constant 0 : index
    %18 = vector.load %arg10[%c0_4, %c0_5, %c0_6, %c0_7] : memref<1x4x16x16xf32, #tpu.memory_space<vmem>>, vector<1x4x16x16xf32>
    %19 = vector.shape_cast %18 : vector<1x4x16x16xf32> to vector<4x16x16xf32>
    %20 = vector.shape_cast %17 : vector<4x16x16xf32> to vector<1x4x16x16xf32>
    tpu.vector_store %arg10[%c0_4, %c0_5, %c0_6, %c0_7], %20 {strides = array<i32>} : memref<1x4x16x16xf32, #tpu.memory_space<vmem>>, vector<1x4x16x16xf32>,
    return
  }
  func.func @transform_0(%arg0: i32, %arg1: i32) -> (i32, i32, i32) {
    %c0_i32 = arith.constant 0 : i32
    %c0_i32_0 = arith.constant 0 : i32
    %c0_i32_1 = arith.constant 0 : i32
    return %arg0, %c0_i32, %c0_i32_0 : i32, i32, i32
  }
  func.func @transform_1(%arg0: i32, %arg1: i32) -> (i32, i32) {
    %c0_i32 = arith.constant 0 : i32
    %c0_i32_0 = arith.constant 0 : i32
    %c0_i32_1 = arith.constant 0 : i32
    return %c0_i32, %c0_i32_0 : i32, i32
  }
  func.func @transform_2(%arg0: i32, %arg1: i32) -> (i32, i32) {
    %c0_i32 = arith.constant 0 : i32
    %c0_i32_0 = arith.constant 0 : i32
    %c0_i32_1 = arith.constant 0 : i32
    return %c0_i32, %c0_i32_0 : i32, i32
  }
  func.func @transform_3(%arg0: i32, %arg1: i32) -> (i32, i32) {
    %c0_i32 = arith.constant 0 : i32
    %c0_i32_0 = arith.constant 0 : i32
    %c0_i32_1 = arith.constant 0 : i32
    return %c0_i32, %c0_i32_0 : i32, i32
  }
  func.func @transform_4(%arg0: i32, %arg1: i32) -> (i32, i32) {
    %c0_i32 = arith.constant 0 : i32
    %c0_i32_0 = arith.constant 0 : i32
    %c0_i32_1 = arith.constant 0 : i32
    return %c0_i32, %c0_i32_0 : i32, i32
  }
  func.func @transform_5(%arg0: i32, %arg1: i32) -> (i32, i32) {
    %c0_i32 = arith.constant 0 : i32
    %c0_i32_0 = arith.constant 0 : i32
    %c0_i32_1 = arith.constant 0 : i32
    return %c0_i32, %c0_i32_0 : i32, i32
  }
  func.func @transform_6(%arg0: i32, %arg1: i32) -> (i32, i32) {
    %c0_i32 = arith.constant 0 : i32
    %c0_i32_0 = arith.constant 0 : i32
    %c0_i32_1 = arith.constant 0 : i32
    return %c0_i32, %c0_i32_0 : i32, i32
  }
  func.func @transform_7(%arg0: i32, %arg1: i32) -> (i32, i32, i32) {
    %c0_i32 = arith.constant 0 : i32
    %c0_i32_0 = arith.constant 0 : i32
    %c0_i32_1 = arith.constant 0 : i32
    return %arg0, %c0_i32, %c0_i32_0 : i32, i32, i32
  }
  func.func @transform_8(%arg0: i32, %arg1: i32) -> (i32, i32, i32, i32) {
    %c0_i32 = arith.constant 0 : i32
    %c0_i32_0 = arith.constant 0 : i32
    %c0_i32_1 = arith.constant 0 : i32
    return %arg0, %arg1, %c0_i32, %c0_i32_0 : i32, i32, i32, i32
  }
}

</mosaic_0001>

<llo_original>
// kernel: tpu_custom_call.1
$region0: #{tpu_custom_call.1}
  #allocation0 [shape = 'u32[]', space=smem, size = 0x4, offset = 0x4, fixed_abs, tag = 'smem constant byte address 0x4 - core index']
  #allocation1 [shape = 'u32[144,128]{1,0:T(1,128)}', space=vmem, size = 0x12000, scoped, tag = 'internal scratch']
  #allocation2 [shape = 'f32[16,16]{1,0:T(8,128)}', space=vmem, size = 0x2000, scoped, tag = 'scratch operand']
  #allocation3 [shape = 'f32[16,16]{1,0:T(8,128)}', space=vmem, size = 0x2000, scoped, tag = 'scratch operand']
  %s0 = inlined_call_operand.vmem [shape: f32[2,16,32], index: 0, kind: input, shape index: {}]
  %s1 = inlined_call_operand.vmem [shape: f32[32,32], index: 1, kind: input, shape index: {}]
  %s2 = inlined_call_operand.vmem [shape: f32[1,32], index: 2, kind: input, shape index: {}]
  %s3 = inlined_call_operand.vmem [shape: f32[32,16], index: 3, kind: input, shape index: {}]
  %s4 = inlined_call_operand.vmem [shape: f32[1,16], index: 4, kind: input, shape index: {}]
  %s5 = inlined_call_operand.vmem [shape: f32[16,8], index: 5, kind: input, shape index: {}]
  %s6 = inlined_call_operand.vmem [shape: f32[16,8], index: 6, kind: input, shape index: {}]
  %s7 = inlined_call_operand.vmem [shape: f32[2,1,16], index: 7, kind: input, shape index: {}]
  %s8 = inlined_call_operand.hbm [shape: f32[2,8,16,16], index: 8, kind: output, shape index: {}]
  %s9 = sld [smem:[#allocation0]]
  $region69: #{tpu_custom_call.1} parent=0
    _
  %s11 = ssub.s32 1, %s9
  %s12 = scalar_select 0, %s11, %s9
  $region1: #{tpu_custom_call.1} parent=0
    #allocation4 [shape = 'u8[65536]{0}', space=vmem, size = 0x10000, scoped, tag = 'output window, operand 0']
    #allocation5 [shape = 's32[2]{0}', space=sflag, size = 0x8, scoped, tag = 'scoped memory for tpu_custom_call.1']
    %13 = vsyncpa [#allocation5], 0
    %s14 = scalar_lea.sflag [#allocation5], 1
    %15 = vsyncpa %s14, 0
    loop: start=0, step=1, limit=6
    $region2: #{tpu_custom_call.1} parent=1 // loop_pre_header
      _
    $region3: #{tpu_custom_call.1} parent=1 // loop_header
      %s17 = sphi 0, %s21
      %p18 = scmp.ge.s32.totalorder %s17, 6
      %s24 = sphi 0, %s36
      %s25 = sphi 0, %s32
      %s26 = sphi 0, %s24
      %s27 = sphi 0, %s25
      %s28 = sphi 0, %s26
      %s29 = sphi 0, %s27
      %s39 = sphi 0, %s41
      %s42 = sphi 0, %s39
      %s43 = sphi 0, %s42
      %s59 = sphi 0, %s43
      %s63 = sphi 0, %s63
      %s65 = sphi 0, %s63
      %s66 = sphi 0, %s65
      %s80 = sphi 0, %s66
      %s84 = sphi 0, %s84
      %s86 = sphi 0, %s84
      %s87 = sphi 0, %s86
      %s101 = sphi 0, %s87
      %s105 = sphi 0, %s105
      %s107 = sphi 0, %s105
      %s108 = sphi 0, %s107
      %s122 = sphi 0, %s108
      %s126 = sphi 0, %s126
      %s128 = sphi 0, %s126
      %s129 = sphi 0, %s128
      %s143 = sphi 0, %s129
      %s147 = sphi 0, %s147
      %s149 = sphi 0, %s147
      %s150 = sphi 0, %s149
      %s164 = sphi 0, %s150
      %s168 = sphi 0, %s168
      %s170 = sphi 0, %s168
      %s171 = sphi 0, %s170
      %s185 = sphi 0, %s171
      %s191 = sphi 0, %s193
      %s194 = sphi 0, %s191
      %s195 = sphi 0, %s194
      %s211 = sphi 0, %s195
      %s219 = sphi 0, %s221
      %s222 = sphi 0, %s219
      %s223 = sphi 0, %s222
      %s239 = sphi 0, %s223
    $region4: #{tpu_custom_call.1} parent=1 // loop_header_branch
      %20 = sbr.rel (%p18) target = $region8
    $region5: #{tpu_custom_call.1} parent=1 // loop_body
      %s22 = ssub.s32 %s17, 1
      %s23 = ssub.s32 %s17, 2
      %s30 = sadd.s32 1, %s25
      %p31 = scmp.ge.s32.totalorder %s30, 2
      %s32 = scalar_select %p31, 0, %s30
      %s33 = sadd.s32 1, %s24
      %s34 = scalar_select %p31, %s33, %s24
      %p35 = scmp.ge.s32.totalorder %s34, 2
      %s36 = scalar_select %p35, 0, %s34
      %s37 = ssub.s32 %s24, %s36
      %p38 = scmp.eq.s32.totalorder %s37, 0
      %s40 = sadd.s32 %s39, 1
      %s41 = scalar_select %p38, %s39, %s40
      %p44 = pneg %p38
      %p45 = scmp.eq.s32.totalorder %s17, 3
      %p46 = por %p44, %p45
      %p47 = scmp.ne.s32.totalorder %s39, %s42
      %p48 = scmp.eq.s32.totalorder %s17, 0
      %p49 = por %p47, %p48
      %p50 = scmp.ne.s32.totalorder %s39, %s42
      %p51 = scmp.eq.s32.totalorder %s22, 3
      %p52 = por %p50, %p51
      %p53 = scmp.ne.s32.totalorder %s42, %s43
      %p54 = scmp.eq.s32.totalorder %s22, 0
      %p55 = por %p53, %p54
      %p56 = scmp.ne.s32.totalorder %s42, %s43
      %p57 = scmp.eq.s32.totalorder %s23, 3
      %p58 = por %p56, %p57
      %p60 = scmp.ne.s32.totalorder %s43, %s59
      %p61 = scmp.eq.s32.totalorder %s23, 0
      %p62 = por %p60, %p61
      %s64 = sadd.s32 %s63, 1
      %p67 = scmp.eq.s32.totalorder %s17, 3
      %p68 = scmp.ne.s32.totalorder %s63, %s65
      %p69 = scmp.eq.s32.totalorder %s17, 0
      %p70 = por %p68, %p69
      %p71 = scmp.ne.s32.totalorder %s63, %s65
      %p72 = scmp.eq.s32.totalorder %s22, 3
      %p73 = por %p71, %p72
      %p74 = scmp.ne.s32.totalorder %s65, %s66
      %p75 = scmp.eq.s32.totalorder %s22, 0
      %p76 = por %p74, %p75
      %p77 = scmp.ne.s32.totalorder %s65, %s66
      %p78 = scmp.eq.s32.totalorder %s23, 3
      %p79 = por %p77, %p78
      %p81 = scmp.ne.s32.totalorder %s66, %s80
      %p82 = scmp.eq.s32.totalorder %s23, 0
      %p83 = por %p81, %p82
      %s85 = sadd.s32 %s84, 1
      %p88 = scmp.eq.s32.totalorder %s17, 3
      %p89 = scmp.ne.s32.totalorder %s84, %s86
      %p90 = scmp.eq.s32.totalorder %s17, 0
      %p91 = por %p89, %p90
      %p92 = scmp.ne.s32.totalorder %s84, %s86
      %p93 = scmp.eq.s32.totalorder %s22, 3
      %p94 = por %p92, %p93
      %p95 = scmp.ne.s32.totalorder %s86, %s87
      %p96 = scmp.eq.s32.totalorder %s22, 0
      %p97 = por %p95, %p96
      %p98 = scmp.ne.s32.totalorder %s86, %s87
      %p99 = scmp.eq.s32.totalorder %s23, 3
      %p100 = por %p98, %p99
      %p102 = scmp.ne.s32.totalorder %s87, %s101
      %p103 = scmp.eq.s32.totalorder %s23, 0
      %p104 = por %p102, %p103
      %s106 = sadd.s32 %s105, 1
      %p109 = scmp.eq.s32.totalorder %s17, 3
      %p110 = scmp.ne.s32.totalorder %s105, %s107
      %p111 = scmp.eq.s32.totalorder %s17, 0
      %p112 = por %p110, %p111
      %p113 = scmp.ne.s32.totalorder %s105, %s107
      %p114 = scmp.eq.s32.totalorder %s22, 3
      %p115 = por %p113, %p114
      %p116 = scmp.ne.s32.totalorder %s107, %s108
      %p117 = scmp.eq.s32.totalorder %s22, 0
      %p118 = por %p116, %p117
      %p119 = scmp.ne.s32.totalorder %s107, %s108
      %p120 = scmp.eq.s32.totalorder %s23, 3
      %p121 = por %p119, %p120
      %p123 = scmp.ne.s32.totalorder %s108, %s122
      %p124 = scmp.eq.s32.totalorder %s23, 0
      %p125 = por %p123, %p124
      %s127 = sadd.s32 %s126, 1
      %p130 = scmp.eq.s32.totalorder %s17, 3
      %p131 = scmp.ne.s32.totalorder %s126, %s128
      %p132 = scmp.eq.s32.totalorder %s17, 0
      %p133 = por %p131, %p132
      %p134 = scmp.ne.s32.totalorder %s126, %s128
      %p135 = scmp.eq.s32.totalorder %s22, 3
      %p136 = por %p134, %p135
      %p137 = scmp.ne.s32.totalorder %s128, %s129
      %p138 = scmp.eq.s32.totalorder %s22, 0
      %p139 = por %p137, %p138
      %p140 = scmp.ne.s32.totalorder %s128, %s129
      %p141 = scmp.eq.s32.totalorder %s23, 3
      %p142 = por %p140, %p141
      %p144 = scmp.ne.s32.totalorder %s129, %s143
      %p145 = scmp.eq.s32.totalorder %s23, 0
      %p146 = por %p144, %p145
      %s148 = sadd.s32 %s147, 1
      %p151 = scmp.eq.s32.totalorder %s17, 3
      %p152 = scmp.ne.s32.totalorder %s147, %s149
      %p153 = scmp.eq.s32.totalorder %s17, 0
      %p154 = por %p152, %p153
      %p155 = scmp.ne.s32.totalorder %s147, %s149
      %p156 = scmp.eq.s32.totalorder %s22, 3
      %p157 = por %p155, %p156
      %p158 = scmp.ne.s32.totalorder %s149, %s150
      %p159 = scmp.eq.s32.totalorder %s22, 0
      %p160 = por %p158, %p159
      %p161 = scmp.ne.s32.totalorder %s149, %s150
      %p162 = scmp.eq.s32.totalorder %s23, 3
      %p163 = por %p161, %p162
      %p165 = scmp.ne.s32.totalorder %s150, %s164
      %p166 = scmp.eq.s32.totalorder %s23, 0
      %p167 = por %p165, %p166
      %s169 = sadd.s32 %s168, 1
      %p172 = scmp.eq.s32.totalorder %s17, 3
      %p173 = scmp.ne.s32.totalorder %s168, %s170
      %p174 = scmp.eq.s32.totalorder %s17, 0
      %p175 = por %p173, %p174
      %p176 = scmp.ne.s32.totalorder %s168, %s170
      %p177 = scmp.eq.s32.totalorder %s22, 3
      %p178 = por %p176, %p177
      %p179 = scmp.ne.s32.totalorder %s170, %s171
      %p180 = scmp.eq.s32.totalorder %s22, 0
      %p181 = por %p179, %p180
      %p182 = scmp.ne.s32.totalorder %s170, %s171
      %p183 = scmp.eq.s32.totalorder %s23, 3
      %p184 = por %p182, %p183
      %p186 = scmp.ne.s32.totalorder %s171, %s185
      %p187 = scmp.eq.s32.totalorder %s23, 0
      %p188 = por %p186, %p187
      %s189 = ssub.s32 %s24, %s36
      %p190 = scmp.eq.s32.totalorder %s189, 0
      %s192 = sadd.s32 %s191, 1
      %s193 = scalar_select %p190, %s191, %s192
      %p196 = pneg %p190
      %p197 = scmp.eq.s32.totalorder %s17, 3
      %p198 = por %p196, %p197
      %p199 = scmp.ne.s32.totalorder %s191, %s194
      %p200 = scmp.eq.s32.totalorder %s17, 0
      %p201 = por %p199, %p200
      %p202 = scmp.ne.s32.totalorder %s191, %s194
      %p203 = scmp.eq.s32.totalorder %s22, 3
      %p204 = por %p202, %p203
      %p205 = scmp.ne.s32.totalorder %s194, %s195
      %p206 = scmp.eq.s32.totalorder %s22, 0
      %p207 = por %p205, %p206
      %p208 = scmp.ne.s32.totalorder %s194, %s195
      %p209 = scmp.eq.s32.totalorder %s23, 3
      %p210 = por %p208, %p209
      %p212 = scmp.ne.s32.totalorder %s195, %s211
      %p213 = scmp.eq.s32.totalorder %s23, 0
      %p214 = por %p212, %p213
      %s215 = ssub.s32 %s24, %s36
      %s216 = ssub.s32 %s25, %s32
      %s217 = sor.u32 %s215, %s216
      %p218 = scmp.eq.s32.totalorder %s217, 0
      %s220 = sadd.s32 %s219, 1
      %s221 = scalar_select %p218, %s219, %s220
      %p224 = pneg %p218
      %p225 = scmp.eq.s32.totalorder %s17, 3
      %p226 = por %p224, %p225
      %p227 = scmp.ne.s32.totalorder %s219, %s222
      %p228 = scmp.eq.s32.totalorder %s17, 0
      %p229 = por %p227, %p228
      %p230 = scmp.ne.s32.totalorder %s219, %s222
      %p231 = scmp.eq.s32.totalorder %s22, 3
      %p232 = por %p230, %p231
      %p233 = scmp.ne.s32.totalorder %s222, %s223
      %p234 = scmp.eq.s32.totalorder %s22, 0
      %p235 = por %p233, %p234
      %p236 = scmp.ne.s32.totalorder %s222, %s223
      %p237 = scmp.eq.s32.totalorder %s23, 3
      %p238 = por %p236, %p237
      %p240 = scmp.ne.s32.totalorder %s223, %s239
      %p241 = scmp.eq.s32.totalorder %s23, 0
      %p242 = por %p240, %p241
      %p243 = scmp.le.s32.totalorder 1, %s17
      %p244 = scmp.lt.s32.totalorder %s17, 5
      %p245 = pnand %p243, %p244
      %p246 = pneg %p245
      // Predicated region
      $region9: #{tpu_custom_call.1} parent=5 // pred_check
        _
      $region10: #{tpu_custom_call.1} parent=5 // pred_check_branch
        %248 = sbr.rel (%p245) target = $region12
      $region11: #{tpu_custom_call.1} parent=5 // pred_region
        %s249 = ssub.s32 %s17, 1
        // Predicated region
        $region13: #{tpu_custom_call.1} parent=11 // pred_check
          %p250 = pneg %p76
        $region14: #{tpu_custom_call.1} parent=11 // pred_check_branch
          %252 = sbr.rel (%p250) target = $region16
        $region15: #{tpu_custom_call.1} parent=11 // pred_region
          _
        $region16: #{tpu_custom_call.1} parent=11 // pred_fallthru
          _
        // Predicated region
        $region17: #{tpu_custom_call.1} parent=11 // pred_check
          %p253 = pneg %p97
        $region18: #{tpu_custom_call.1} parent=11 // pred_check_branch
          %255 = sbr.rel (%p253) target = $region20
        $region19: #{tpu_custom_call.1} parent=11 // pred_region
          _
        $region20: #{tpu_custom_call.1} parent=11 // pred_fallthru
          _
        // Predicated region
        $region21: #{tpu_custom_call.1} parent=11 // pred_check
          %p256 = pneg %p118
        $region22: #{tpu_custom_call.1} parent=11 // pred_check_branch
          %258 = sbr.rel (%p256) target = $region24
        $region23: #{tpu_custom_call.1} parent=11 // pred_region
          _
        $region24: #{tpu_custom_call.1} parent=11 // pred_fallthru
          _
        // Predicated region
        $region25: #{tpu_custom_call.1} parent=11 // pred_check
          %p259 = pneg %p139
        $region26: #{tpu_custom_call.1} parent=11 // pred_check_branch
          %261 = sbr.rel (%p259) target = $region28
        $region27: #{tpu_custom_call.1} parent=11 // pred_region
          _
        $region28: #{tpu_custom_call.1} parent=11 // pred_fallthru
          _
        // Predicated region
        $region29: #{tpu_custom_call.1} parent=11 // pred_check
          %p262 = pneg %p160
        $region30: #{tpu_custom_call.1} parent=11 // pred_check_branch
          %264 = sbr.rel (%p262) target = $region32
        $region31: #{tpu_custom_call.1} parent=11 // pred_region
          _
        $region32: #{tpu_custom_call.1} parent=11 // pred_fallthru
          _
        // Predicated region
        $region33: #{tpu_custom_call.1} parent=11 // pred_check
          %p265 = pneg %p181
        $region34: #{tpu_custom_call.1} parent=11 // pred_check_branch
          %267 = sbr.rel (%p265) target = $region36
        $region35: #{tpu_custom_call.1} parent=11 // pred_region
          _
        $region36: #{tpu_custom_call.1} parent=11 // pred_fallthru
          _
      $region12: #{tpu_custom_call.1} parent=5 // pred_fallthru
        _
      %p268 = scmp.lt.s32.totalorder %s17, 4
      // Predicated region
      $region37: #{tpu_custom_call.1} parent=5 // pred_check
        %p269 = pneg %p268
      $region38: #{tpu_custom_call.1} parent=5 // pred_check_branch
        %271 = sbr.rel (%p269) target = $region40
      $region39: #{tpu_custom_call.1} parent=5 // pred_region
        // Predicated region
        $region41: #{tpu_custom_call.1} parent=39 // pred_check
          %p272 = pneg %p49
        $region42: #{tpu_custom_call.1} parent=39 // pred_check_branch
          %274 = sbr.rel (%p272) target = $region44
        $region43: #{tpu_custom_call.1} parent=39 // pred_region
          %p275 = scmp.lt.s32.totalorder %s24, 1
          %s276 = scalar_select %p275, %s24, 1
          %s277 = smul.addr %s276, 2
          %s278 = smul.addr %s277, 8
          %s279 = scalar_lea.vmem %s0, %s278
        $region44: #{tpu_custom_call.1} parent=39 // pred_fallthru
          _
        // Predicated region
        $region45: #{tpu_custom_call.1} parent=39 // pred_check
          %p280 = pneg %p201
        $region46: #{tpu_custom_call.1} parent=39 // pred_check_branch
          %282 = sbr.rel (%p280) target = $region48
        $region47: #{tpu_custom_call.1} parent=39 // pred_region
          %p283 = scmp.lt.s32.totalorder %s24, 1
          %s284 = scalar_select %p283, %s24, 1
          %s285 = scalar_lea.vmem %s7, %s284
        $region48: #{tpu_custom_call.1} parent=39 // pred_fallthru
          _
      $region40: #{tpu_custom_call.1} parent=5 // pred_fallthru
        _
      %p286 = scmp.le.s32.totalorder 1, %s17
      %p287 = scmp.lt.s32.totalorder %s17, 5
      %p288 = pnand %p286, %p287
      %p289 = pneg %p288
      // Predicated region
      $region49: #{tpu_custom_call.1} parent=5 // pred_check
        _
      $region50: #{tpu_custom_call.1} parent=5 // pred_check_branch
        %291 = sbr.rel (%p288) target = $region52
      $region51: #{tpu_custom_call.1} parent=5 // pred_region
        %s292 = ssub.s32 %s17, 1
        %p293 = scmp.lt.s32.totalorder %s26, 1
        %s294 = scalar_select %p293, %s26, 1
        %s295 = smul.addr %s294, 2
        %s296 = smul.addr %s295, 8
        %s297 = scalar_lea.vmem %s0, %s296
        %p298 = pneg %p55
        %p299 = pneg %p52
        %p300 = pneg %p76
        %p301 = pneg %p73
        %p302 = pneg %p97
        %p303 = pneg %p94
        %p304 = pneg %p118
        %p305 = pneg %p115
        %p306 = pneg %p139
        %p307 = pneg %p136
        %p308 = pneg %p160
        %p309 = pneg %p157
        %p310 = pneg %p181
        %p311 = pneg %p178
        %p312 = scmp.lt.s32.totalorder %s26, 1
        %s313 = scalar_select %p312, %s26, 1
        %s314 = scalar_lea.vmem %s7, %s313
        %p315 = pneg %p207
        %p316 = pneg %p204
        %p317 = pneg %p235
        %p318 = pneg %p232
        %s319 = sand.u32 %s222, 1
        %s320 = scalar_lea.sflag [#allocation5], %s319
        %s321 = sand.u32 %s222, 1
        %s322 = smul.addr %s321, 64
        %s323 = scalar_lea.vmem [#allocation4], %s322
        %p324 = scmp.lt.s32.totalorder %s26, 1
        %s325 = scalar_select %p324, %s26, 1
        %s326 = smul.addr %s325, 2
        %s327 = smul.addr %s326, 8
        %s328 = scalar_lea.vmem %s0, %s327
        %p329 = scmp.lt.s32.totalorder %s26, 1
        %s330 = scalar_select %p329, %s26, 1
        %s331 = scalar_lea.vmem %s7, %s330
        %s332 = smul.u32 4, %s27
        %p333 = scmp.eq.s32.totalorder %s27, 0
        // Predicated region
        $region53: #{tpu_custom_call.1} parent=51 // pred_check
          %p334 = pneg %p333
        $region54: #{tpu_custom_call.1} parent=51 // pred_check_branch
          %336 = sbr.rel (%p334) target = $region56
        $region55: #{tpu_custom_call.1} parent=51 // pred_region
          %v337 = vld [vmem:[%s328] sm:$0xff]
          %v338 = vld [vmem:[%s328 + $0x8] sm:$0xff]
          %v339 = vld [vmem:[%s1] sm:$0xff]
          %v340 = vld [vmem:[%s1 + $0x8] sm:$0xff]
          %v341 = vld [vmem:[%s1 + $0x10] sm:$0xff]
          %v342 = vld [vmem:[%s1 + $0x18] sm:$0xff]
          %v343 = vld [vmem:[%s2] sm:$0x1]
          %v345 = vlaneseq
          %v346 = vshrl.u32 %v345, 7
          %v347 = vsub.s32 0, %v346
          %v348 = vrot.slane %v343, %v347
          %vm350 = vcmask 261120
          %v352 = vsel %vm350, %v337, 0
          %v355 = vsel %vm350, %v338, 0
          %357 = vmatprep.subr.mxu0 0.0
          %358 = vmatpush1.msra.mxu0 %v339
          %359 = vmatprep.subr.mxu0 0.0
          %360 = vmatpush1.msra.mxu0 %v340
          %361 = vmatprep.subr.mxu0 0.0
          %362 = vmatpush1.msra.mxu0 %v341
          %363 = vmatprep.subr.mxu0 0.0
          %364 = vmatpush1.msra.mxu0 %v342
          %365 = vmatprep.subr.mxu0 0.0
          %366 = vmatpush1.msra.mxu0 0.0
          %367 = vmatprep.subr.mxu0 0.0
          %368 = vmatpush1.msra.mxu0 0.0
          %369 = vmatprep.subr.mxu0 0.0
          %370 = vmatpush1.msra.mxu0 0.0
          %371 = vmatprep.subr.mxu0 0.0
          %372 = vmatpush1.msra.mxu0 0.0
          %373 = vmatprep.subr.mxu0 0.0
          %374 = vmatpush1.msra.mxu0 0.0
          %375 = vmatprep.subr.mxu0 0.0
          %376 = vmatpush1.msra.mxu0 0.0
          %377 = vmatprep.subr.mxu0 0.0
          %378 = vmatpush1.msra.mxu0 0.0
          %379 = vmatprep.subr.mxu0 0.0
          %380 = vmatpush1.msra.mxu0 0.0
          %381 = vmatprep.subr.mxu0 0.0
          %382 = vmatpush1.msra.mxu0 0.0
          %383 = vmatprep.subr.mxu0 0.0
          %384 = vmatpush1.msra.mxu0 0.0
          %385 = vmatprep.subr.mxu0 0.0
          %386 = vmatpush1.msra.mxu0 0.0
          %387 = vmatprep.subr.mxu0 0.0
          %388 = vmatpush1.msra.mxu0 0.0
          %389 = vmatprep.subr.mxu0 0.0
          %390 = vmatpush1.msra.mxu0 0.0
          %391 = vmatprep.subr.mxu0 0.0
          %392 = vmatpush1.msra.mxu0 0.0
          %393 = vmatprep.subr.mxu0 0.0
          %394 = vmatpush1.msra.mxu0 0.0
          %395 = vmatprep.subr.mxu0 0.0
          %396 = vmatpush1.msra.mxu0 0.0
          %397 = vmatprep.subr.mxu0 0.0
          %398 = vmatpush1.msra.mxu0 0.0
          %399 = vmatprep.subr.mxu0 0.0
          %400 = vmatpush1.msra.mxu0 0.0
          %401 = vmatprep.subr.mxu0 0.0
          %402 = vmatpush1.msra.mxu0 0.0
          %403 = vmatprep.subr.mxu0 0.0
          %404 = vmatpush1.msra.mxu0 0.0
          %405 = vmatprep.subr.mxu0 0.0
          %406 = vmatpush1.msra.mxu0 0.0
          %407 = vmatprep.subr.mxu0 0.0
          %408 = vmatpush1.msra.mxu0 0.0
          %409 = vmatprep.subr.mxu0 0.0
          %410 = vmatpush1.msra.mxu0 0.0
          %411 = vmatprep.subr.mxu0 0.0
          %412 = vmatpush1.msra.mxu0 0.0
          %413 = vmatprep.subr.mxu0 0.0
          %414 = vmatpush1.msra.mxu0 0.0
          %415 = vmatprep.subr.mxu0 0.0
          %416 = vmatpush1.msra.mxu0 0.0
          %417 = vmatprep.subr.mxu0 0.0
          %418 = vmatpush1.msra.mxu0 0.0
          %419 = vmatprep.subr.mxu0 0.0
          %420 = vmatpush1.msra.mxu0 0.0
          %421 = vmatprep.mubr.f32.mxu0 0.0
          %422 = vmatmul.mubr.f32.gmra.mrb[0].mxu0 %v352
          %v423 = vpop.f32.mrb[0].mxu0
          %v424 = vadd.f32 %v348, %v423
          %v425 = vpop.f32.mrb[0].mxu0
          %426 = vmatprep.mubr.f32.mxu0 0.0
          %427 = vmatmul.mubr.f32.gmra.mrb[0].mxu0 %v355
          %v428 = vpop.f32.mrb[0].mxu0
          %v429 = vadd.f32 %v348, %v428
          %v430 = vpop.f32.mrb[0].mxu0
          %431 = vdwg.mxu0
          %v432 = vld [vmem:[%s5] sm:$0xff]
          %v433 = vld [vmem:[%s5 + $0x8] sm:$0xff]
          %v434 = vld [vmem:[%s6] sm:$0xff]
          %v435 = vld [vmem:[%s6 + $0x8] sm:$0xff]
          %v436 = vmul.f32 %v424, %v434
          %v437 = vmul.f32 %v429, %v435
          %440 = vrot.lane.b32.xlu0 %v432, 8
          %v441 = vpop.permute.xlu0 %440
          %442 = vrot.lane.b32.xlu0 %v433, 8
          %v443 = vpop.permute.xlu0 %442
          %v446 = vmul.f32 %v424, %v441
          %v447 = vmul.f32 %v429, %v443
          %450 = vrot.lane.b32.xlu0 %v446, 120
          %v451 = vpop.permute.xlu0 %450
          %452 = vrot.lane.b32.xlu0 %v447, 120
          %v453 = vpop.permute.xlu0 %452
          %v456 = vsub.f32 %v436, %v451
          %v457 = vsub.f32 %v437, %v453
          %v458 = vmul.f32 %v424, %v432
          %v459 = vmul.f32 %v429, %v433
          %462 = vrot.lane.b32.xlu0 %v434, 8
          %v463 = vpop.permute.xlu0 %462
          %464 = vrot.lane.b32.xlu0 %v435, 8
          %v465 = vpop.permute.xlu0 %464
          %v468 = vmul.f32 %v424, %v463
          %v469 = vmul.f32 %v429, %v465
          %472 = vrot.lane.b32.xlu0 %v468, 120
          %v473 = vpop.permute.xlu0 %472
          %474 = vrot.lane.b32.xlu0 %v469, 120
          %v475 = vpop.permute.xlu0 %474
          %v478 = vadd.f32 %v458, %v473
          %v479 = vadd.f32 %v459, %v475
          %482 = vrot.lane.b32.xlu0 %v478, 8
          %v483 = vpop.permute.xlu0 %482
          %484 = vrot.lane.b32.xlu0 %v479, 8
          %v485 = vpop.permute.xlu0 %484
          %vm488 = vcmask 64512
          %v489 = vsel %vm488, %v456, %v483
          %v490 = vsel %vm488, %v457, %v485
          %v491 = vmul.f32 %v489, 0.25
          %v492 = vmul.f32 %v490, 0.25
          %493 = vrot.lane.b32.xlu0 %v434, 16
          %v494 = vpop.permute.xlu0 %493
          %495 = vrot.lane.b32.xlu0 %v435, 16
          %v496 = vpop.permute.xlu0 %495
          %v499 = vmul.f32 %v424, %v494
          %v500 = vmul.f32 %v429, %v496
          %501 = vrot.lane.b32.xlu0 %v432, 24
          %v502 = vpop.permute.xlu0 %501
          %503 = vrot.lane.b32.xlu0 %v433, 24
          %v504 = vpop.permute.xlu0 %503
          %v507 = vmul.f32 %v424, %v502
          %v508 = vmul.f32 %v429, %v504
          %511 = vrot.lane.b32.xlu0 %v507, 120
          %v512 = vpop.permute.xlu0 %511
          %513 = vrot.lane.b32.xlu0 %v508, 120
          %v514 = vpop.permute.xlu0 %513
          %v517 = vsub.f32 %v499, %v512
          %v518 = vsub.f32 %v500, %v514
          %519 = vrot.lane.b32.xlu0 %v432, 16
          %v520 = vpop.permute.xlu0 %519
          %521 = vrot.lane.b32.xlu0 %v433, 16
          %v522 = vpop.permute.xlu0 %521
          %v525 = vmul.f32 %v424, %v520
          %v526 = vmul.f32 %v429, %v522
          %527 = vrot.lane.b32.xlu0 %v434, 24
          %v528 = vpop.permute.xlu0 %527
          %529 = vrot.lane.b32.xlu0 %v435, 24
          %v530 = vpop.permute.xlu0 %529
          %v533 = vmul.f32 %v424, %v528
          %v534 = vmul.f32 %v429, %v530
          %537 = vrot.lane.b32.xlu0 %v533, 120
          %v538 = vpop.permute.xlu0 %537
          %539 = vrot.lane.b32.xlu0 %v534, 120
          %v540 = vpop.permute.xlu0 %539
          %v543 = vadd.f32 %v525, %v538
          %v544 = vadd.f32 %v526, %v540
          %547 = vrot.lane.b32.xlu0 %v517, 112
          %v548 = vpop.permute.xlu0 %547
          %549 = vrot.lane.b32.xlu0 %v518, 112
          %v550 = vpop.permute.xlu0 %549
          %555 = vrot.lane.b32.xlu0 %v543, 120
          %v556 = vpop.permute.xlu0 %555
          %557 = vrot.lane.b32.xlu0 %v544, 120
          %v558 = vpop.permute.xlu0 %557
          %v561 = vsel %vm488, %v548, %v556
          %v562 = vsel %vm488, %v550, %v558
          %vm563 = vcmask 130048
          %v565 = vsel %vm563, %v491, 0
          %v568 = vsel %vm563, %v492, 0
          %v571 = vsel %vm563, %v561, 0
          %v574 = vsel %vm563, %v562, 0
          %576 = vmatprep.subr.mxu0 0.0
          %577 = vmatpush1.xpose.msra.mxu0 %v571
          %578 = vmatprep.subr.mxu0 0.0
          %579 = vmatpush1.xpose.msra.mxu0 %v574
          %580 = vmatprep.subr.mxu0 0.0
          %581 = vmatpush1.xpose.msra.mxu0 0.0
          %582 = vmatprep.subr.mxu0 0.0
          %583 = vmatpush1.xpose.msra.mxu0 0.0
          %584 = vmatprep.subr.mxu0 0.0
          %585 = vmatpush1.xpose.msra.mxu0 0.0
          %586 = vmatprep.subr.mxu0 0.0
          %587 = vmatpush1.xpose.msra.mxu0 0.0
          %588 = vmatprep.subr.mxu0 0.0
          %589 = vmatpush1.xpose.msra.mxu0 0.0
          %590 = vmatprep.subr.mxu0 0.0
          %591 = vmatpush1.xpose.msra.mxu0 0.0
          %592 = vmatprep.subr.mxu0 0.0
          %593 = vmatpush1.xpose.msra.mxu0 0.0
          %594 = vmatprep.subr.mxu0 0.0
          %595 = vmatpush1.xpose.msra.mxu0 0.0
          %596 = vmatprep.subr.mxu0 0.0
          %597 = vmatpush1.xpose.msra.mxu0 0.0
          %598 = vmatprep.subr.mxu0 0.0
          %599 = vmatpush1.xpose.msra.mxu0 0.0
          %600 = vmatprep.subr.mxu0 0.0
          %601 = vmatpush1.xpose.msra.mxu0 0.0
          %602 = vmatprep.subr.mxu0 0.0
          %603 = vmatpush1.xpose.msra.mxu0 0.0
          %604 = vmatprep.subr.mxu0 0.0
          %605 = vmatpush1.xpose.msra.mxu0 0.0
          %606 = vmatprep.subr.mxu0 0.0
          %607 = vmatpush1.xpose.msra.mxu0 0.0
          %608 = vmatprep.subr.mxu0 0.0
          %609 = vmatpush1.xpose.msra.mxu0 0.0
          %610 = vmatprep.subr.mxu0 0.0
          %611 = vmatpush1.xpose.msra.mxu0 0.0
          %612 = vmatprep.subr.mxu0 0.0
          %613 = vmatpush1.xpose.msra.mxu0 0.0
          %614 = vmatprep.subr.mxu0 0.0
          %615 = vmatpush1.xpose.msra.mxu0 0.0
          %616 = vmatprep.subr.mxu0 0.0
          %617 = vmatpush1.xpose.msra.mxu0 0.0
          %618 = vmatprep.subr.mxu0 0.0
          %619 = vmatpush1.xpose.msra.mxu0 0.0
          %620 = vmatprep.subr.mxu0 0.0
          %621 = vmatpush1.xpose.msra.mxu0 0.0
          %622 = vmatprep.subr.mxu0 0.0
          %623 = vmatpush1.xpose.msra.mxu0 0.0
          %624 = vmatprep.subr.mxu0 0.0
          %625 = vmatpush1.xpose.msra.mxu0 0.0
          %626 = vmatprep.subr.mxu0 0.0
          %627 = vmatpush1.xpose.msra.mxu0 0.0
          %628 = vmatprep.subr.mxu0 0.0
          %629 = vmatpush1.xpose.msra.mxu0 0.0
          %630 = vmatprep.subr.mxu0 0.0
          %631 = vmatpush1.xpose.msra.mxu0 0.0
          %632 = vmatprep.subr.mxu0 0.0
          %633 = vmatpush1.xpose.msra.mxu0 0.0
          %634 = vmatprep.subr.mxu0 0.0
          %635 = vmatpush1.xpose.msra.mxu0 0.0
          %636 = vmatprep.subr.mxu0 0.0
          %637 = vmatpush1.xpose.msra.mxu0 0.0
          %638 = vmatprep.subr.mxu0 0.0
          %639 = vmatpush1.xpose.msra.mxu0 0.0
          %640 = vmatprep.mubr.f32.mxu0 0.0
          %641 = vmatmul.mubr.f32.gmra.mrb[0].mxu0 %v565
          %v642 = vpop.f32.mrb[0].mxu0
          %v643 = vadd.f32 0.0, %v642
          %v644 = vpop.f32.mrb[0].mxu0
          %645 = vmatprep.mubr.f32.mxu0 0.0
          %646 = vmatmul.mubr.f32.gmra.mrb[0].mxu0 %v568
          %v647 = vpop.f32.mrb[0].mxu0
          %v648 = vadd.f32 0.0, %v647
          %v649 = vpop.f32.mrb[0].mxu0
          %650 = vdwg.mxu0
          %v651 = vld [vmem:[%s331] sm:$0x1]
          %652 = vxpose.xlu0.b32.start [1/16] %v651, 128
          %653 = vxpose.xlu0.b32.cont [2/16] 0.0, 128
          %654 = vxpose.xlu0.b32.cont [3/16] 0.0, 128
          %655 = vxpose.xlu0.b32.cont [4/16] 0.0, 128
          %656 = vxpose.xlu0.b32.cont [5/16] 0.0, 128
          %657 = vxpose.xlu0.b32.cont [6/16] 0.0, 128
          %658 = vxpose.xlu0.b32.cont [7/16] 0.0, 128
          %659 = vxpose.xlu0.b32.cont [8/16] 0.0, 128
          %660 = vxpose.xlu0.b32.cont [9/16] 0.0, 128
          %661 = vxpose.xlu0.b32.cont [10/16] 0.0, 128
          %662 = vxpose.xlu0.b32.cont [11/16] 0.0, 128
          %663 = vxpose.xlu0.b32.cont [12/16] 0.0, 128
          %664 = vxpose.xlu0.b32.cont [13/16] 0.0, 128
          %665 = vxpose.xlu0.b32.cont [14/16] 0.0, 128
          %666 = vxpose.xlu0.b32.cont [15/16] 0.0, 128
          %667 = vxpose.xlu0.b32.end [16/16] 0.0, 128
          %v668 = vpop.trf.xlu0
          %v669 = vpop.trf.xlu0
          %v670 = vpop.trf.xlu0
          %v671 = vpop.trf.xlu0
          %v672 = vpop.trf.xlu0
          %v673 = vpop.trf.xlu0
          %v674 = vpop.trf.xlu0
          %v675 = vpop.trf.xlu0
          %v676 = vpop.trf.xlu0
          %v677 = vpop.trf.xlu0
          %v678 = vpop.trf.xlu0
          %v679 = vpop.trf.xlu0
          %v680 = vpop.trf.xlu0
          %v681 = vpop.trf.xlu0
          %v682 = vpop.trf.xlu0
          %v683 = vpop.trf.xlu0
          %v685 = vlaneseq
          %v686 = vshrl.u32 %v685, 7
          %v687 = vsub.s32 0, %v686
          %v688 = vrot.slane %v651, %v687
          %691 = vset.pattern.permute.xlu0 0
          %692 = vperm.xlu0 %691, %v668
          %v693 = vpop.permute.xlu0 %692
          %696 = vset.pattern.permute.xlu0 0
          %697 = vperm.xlu0 %696, %v669
          %v698 = vpop.permute.xlu0 %697
          %v700 = vmul.f32 %v688, %v693
          %v701 = vmul.f32 %v688, %v698
          %v702 = vsub.f32 1.0, %v700
          %v703 = vsub.f32 1.0, %v701
          %v704 = vlaneseq
          %v705 = vshrl.u32 %v704, 7
          %v706 = vadd.s32 %v705, 8
          %v707 = vlaneseq
          %v708 = vand.u32 %v707, 127
          %vm709 = vcmp.gt.s32.totalorder %v705, %v708
          %vm710 = vcmp.gt.s32.totalorder %v706, %v708
          %v711 = vsel %vm709, 1, 0
          %v712 = vsel %vm710, 1, 0
          %v713 = vcvt.s32.f32 %v711
          %v714 = vcvt.s32.f32 %v712
          %v715 = vadd.f32 %v702, %v713
          %v716 = vadd.f32 %v703, %v714
          %v717 = vmul.f32 %v715, 1e+12
          %v718 = vmul.f32 %v716, 1e+12
          %v719 = vsub.f32 %v643, %v717
          %v720 = vsub.f32 %v648, %v718
          %721 = vst.msk [vmem:[#allocation2] sm:$0xff] %vm563, %v719
          %722 = vst.msk [vmem:[#allocation2 + $0x8] sm:$0xff] %vm563, %v720
          %v723 = vld [vmem:[%s3] sm:$0xff]
          %v724 = vld [vmem:[%s3 + $0x8] sm:$0xff]
          %v725 = vld [vmem:[%s3 + $0x10] sm:$0xff]
          %v726 = vld [vmem:[%s3 + $0x18] sm:$0xff]
          %v727 = vld [vmem:[%s4] sm:$0x1]
          %v729 = vlaneseq
          %v730 = vshrl.u32 %v729, 7
          %v731 = vsub.s32 0, %v730
          %v732 = vrot.slane %v727, %v731
          %v735 = vsel %vm350, %v424, 0
          %v738 = vsel %vm350, %v429, 0
          %740 = vmatprep.subr.mxu0 0.0
          %741 = vmatpush1.msra.mxu0 %v723
          %742 = vmatprep.subr.mxu0 0.0
          %743 = vmatpush1.msra.mxu0 %v724
          %744 = vmatprep.subr.mxu0 0.0
          %745 = vmatpush1.msra.mxu0 %v725
          %746 = vmatprep.subr.mxu0 0.0
          %747 = vmatpush1.msra.mxu0 %v726
          %748 = vmatprep.subr.mxu0 0.0
          %749 = vmatpush1.msra.mxu0 0.0
          %750 = vmatprep.subr.mxu0 0.0
          %751 = vmatpush1.msra.mxu0 0.0
          %752 = vmatprep.subr.mxu0 0.0
          %753 = vmatpush1.msra.mxu0 0.0
          %754 = vmatprep.subr.mxu0 0.0
          %755 = vmatpush1.msra.mxu0 0.0
          %756 = vmatprep.subr.mxu0 0.0
          %757 = vmatpush1.msra.mxu0 0.0
          %758 = vmatprep.subr.mxu0 0.0
          %759 = vmatpush1.msra.mxu0 0.0
          %760 = vmatprep.subr.mxu0 0.0
          %761 = vmatpush1.msra.mxu0 0.0
          %762 = vmatprep.subr.mxu0 0.0
          %763 = vmatpush1.msra.mxu0 0.0
          %764 = vmatprep.subr.mxu0 0.0
          %765 = vmatpush1.msra.mxu0 0.0
          %766 = vmatprep.subr.mxu0 0.0
          %767 = vmatpush1.msra.mxu0 0.0
          %768 = vmatprep.subr.mxu0 0.0
          %769 = vmatpush1.msra.mxu0 0.0
          %770 = vmatprep.subr.mxu0 0.0
          %771 = vmatpush1.msra.mxu0 0.0
          %772 = vmatprep.subr.mxu0 0.0
          %773 = vmatpush1.msra.mxu0 0.0
          %774 = vmatprep.subr.mxu0 0.0
          %775 = vmatpush1.msra.mxu0 0.0
          %776 = vmatprep.subr.mxu0 0.0
          %777 = vmatpush1.msra.mxu0 0.0
          %778 = vmatprep.subr.mxu0 0.0
          %779 = vmatpush1.msra.mxu0 0.0
          %780 = vmatprep.subr.mxu0 0.0
          %781 = vmatpush1.msra.mxu0 0.0
          %782 = vmatprep.subr.mxu0 0.0
          %783 = vmatpush1.msra.mxu0 0.0
          %784 = vmatprep.subr.mxu0 0.0
          %785 = vmatpush1.msra.mxu0 0.0
          %786 = vmatprep.subr.mxu0 0.0
          %787 = vmatpush1.msra.mxu0 0.0
          %788 = vmatprep.subr.mxu0 0.0
          %789 = vmatpush1.msra.mxu0 0.0
          %790 = vmatprep.subr.mxu0 0.0
          %791 = vmatpush1.msra.mxu0 0.0
          %792 = vmatprep.subr.mxu0 0.0
          %793 = vmatpush1.msra.mxu0 0.0
          %794 = vmatprep.subr.mxu0 0.0
          %795 = vmatpush1.msra.mxu0 0.0
          %796 = vmatprep.subr.mxu0 0.0
          %797 = vmatpush1.msra.mxu0 0.0
          %798 = vmatprep.subr.mxu0 0.0
          %799 = vmatpush1.msra.mxu0 0.0
          %800 = vmatprep.subr.mxu0 0.0
          %801 = vmatpush1.msra.mxu0 0.0
          %802 = vmatprep.subr.mxu0 0.0
          %803 = vmatpush1.msra.mxu0 0.0
          %804 = vmatprep.mubr.f32.mxu0 0.0
          %805 = vmatmul.mubr.f32.gmra.mrb[0].mxu0 %v735
          %v806 = vpop.f32.mrb[0].mxu0
          %v807 = vadd.f32 %v732, %v806
          %v808 = vpop.f32.mrb[0].mxu0
          %809 = vmatprep.mubr.f32.mxu0 0.0
          %810 = vmatmul.mubr.f32.gmra.mrb[0].mxu0 %v738
          %v811 = vpop.f32.mrb[0].mxu0
          %v812 = vadd.f32 %v732, %v811
          %v813 = vpop.f32.mrb[0].mxu0
          %814 = vdwg.mxu0
          %v815 = vmul.f32 %v807, 0.5
          %v816 = vmul.f32 %v812, 0.5
          %817 = vxpose.xlu0.b32.start [1/16] %v815, 128
          %818 = vxpose.xlu0.b32.cont [2/16] %v816, 128
          %819 = vxpose.xlu0.b32.cont [3/16] 0.0, 128
          %820 = vxpose.xlu0.b32.cont [4/16] 0.0, 128
          %821 = vxpose.xlu0.b32.cont [5/16] 0.0, 128
          %822 = vxpose.xlu0.b32.cont [6/16] 0.0, 128
          %823 = vxpose.xlu0.b32.cont [7/16] 0.0, 128
          %824 = vxpose.xlu0.b32.cont [8/16] 0.0, 128
          %825 = vxpose.xlu0.b32.cont [9/16] 0.0, 128
          %826 = vxpose.xlu0.b32.cont [10/16] 0.0, 128
          %827 = vxpose.xlu0.b32.cont [11/16] 0.0, 128
          %828 = vxpose.xlu0.b32.cont [12/16] 0.0, 128
          %829 = vxpose.xlu0.b32.cont [13/16] 0.0, 128
          %830 = vxpose.xlu0.b32.cont [14/16] 0.0, 128
          %831 = vxpose.xlu0.b32.cont [15/16] 0.0, 128
          %832 = vxpose.xlu0.b32.end [16/16] 0.0, 128
          %v833 = vpop.trf.xlu0
          %v834 = vpop.trf.xlu0
          %v835 = vpop.trf.xlu0
          %v836 = vpop.trf.xlu0
          %v837 = vpop.trf.xlu0
          %v838 = vpop.trf.xlu0
          %v839 = vpop.trf.xlu0
          %v840 = vpop.trf.xlu0
          %v841 = vpop.trf.xlu0
          %v842 = vpop.trf.xlu0
          %v843 = vpop.trf.xlu0
          %v844 = vpop.trf.xlu0
          %v845 = vpop.trf.xlu0
          %v846 = vpop.trf.xlu0
          %v847 = vpop.trf.xlu0
          %v848 = vpop.trf.xlu0
          %849 = vst.msk [vmem:[#allocation3] sm:$0xff] %vm563, %v833
          %850 = vst.msk [vmem:[#allocation3 + $0x8] sm:$0xff] %vm563, %v834
        $region56: #{tpu_custom_call.1} parent=51 // pred_fallthru
          _
        %s851 = smul.u32 %s27, 4
        %s852 = scalar_lea.vmem [#allocation3], %s851
        %v853 = vld [vmem:[%s852] sm:$0xf]
        %s854 = sadd.s32 %s851, 8
        %s855 = scalar_lea.vmem [#allocation3], %s854
        %v856 = vld [vmem:[%s855] sm:$0xf]
        %v857 = vld [vmem:[#allocation2] sm:$0xff]
        %v858 = vld [vmem:[#allocation2 + $0x8] sm:$0xff]
        %v861 = vunpack.c.l.s4 1966171168
        %v862 = vunpack.c.0.s8 %v861
        %v863 = vlaneseq
        %v864 = vshrl.u32 %v863, 7
        %v865 = vsub.s32 %v862, %v864
        %v866 = vrot.slane %v853, %v865
        %v867 = vcombine.high %v866, %v866
        %v869 = vunpack.c.l.s4 1966171168
        %v870 = vunpack.c.0.s8 %v869
        %v871 = vlaneseq
        %v872 = vshrl.u32 %v871, 7
        %v873 = vsub.s32 %v870, %v872
        %v874 = vrot.slane %v866, %v873
        %v876 = vunpack.c.l.s4 1966171168
        %v877 = vunpack.c.0.s8 %v876
        %v878 = vlaneseq
        %v879 = vshrl.u32 %v878, 7
        %v880 = vsub.s32 %v877, %v879
        %v881 = vrot.slane %v867, %v880
        %v882 = vcombine.high %v874, %v874
        %v883 = vcombine.high %v881, %v881
        %v884 = vlaneseq
        %v885 = vshrl.u32 %v884, 7
        %v886 = vsub.s32 0, %v885
        %v887 = vrot.slane %v874, %v886
        %v888 = vlaneseq
        %v889 = vshrl.u32 %v888, 7
        %v890 = vsub.s32 0, %v889
        %v891 = vrot.slane %v881, %v890
        %v892 = vlaneseq
        %v893 = vshrl.u32 %v892, 7
        %v894 = vsub.s32 0, %v893
        %v895 = vrot.slane %v882, %v894
        %v896 = vlaneseq
        %v897 = vshrl.u32 %v896, 7
        %v898 = vsub.s32 0, %v897
        %v899 = vrot.slane %v883, %v898
        %v904 = vadd.f32 %v857, %v887
        %v905 = vadd.f32 %v858, %v887
        %v906 = vadd.f32 %v857, %v891
        %v907 = vadd.f32 %v858, %v891
        %v908 = vadd.f32 %v857, %v895
        %v909 = vadd.f32 %v858, %v895
        %v910 = vadd.f32 %v857, %v899
        %v911 = vadd.f32 %v858, %v899
        %v912 = vlaneseq
        %v913 = vshrl.u32 %v912, 7
        %v914 = vsub.s32 0, %v913
        %v915 = vrot.slane %v856, %v914
        %917 = vbcast.lane.b32.xlu0 %v915, 256
        %v918 = vpop.permute.xlu0 %917
        %s920 = sor.u32 256, 8
        %921 = vbcast.lane.b32.xlu0 %v915, %s920
        %v922 = vpop.permute.xlu0 %921
        %v923 = vlaneseq
        %v924 = vshrl.u32 %v923, 7
        %v925 = vsub.s32 1, %v924
        %v926 = vrot.slane %v856, %v925
        %928 = vbcast.lane.b32.xlu0 %v926, 256
        %v929 = vpop.permute.xlu0 %928
        %s931 = sor.u32 256, 8
        %932 = vbcast.lane.b32.xlu0 %v926, %s931
        %v933 = vpop.permute.xlu0 %932
        %v934 = vlaneseq
        %v935 = vshrl.u32 %v934, 7
        %v936 = vsub.s32 2, %v935
        %v937 = vrot.slane %v856, %v936
        %939 = vbcast.lane.b32.xlu0 %v937, 256
        %v940 = vpop.permute.xlu0 %939
        %s942 = sor.u32 256, 8
        %943 = vbcast.lane.b32.xlu0 %v937, %s942
        %v944 = vpop.permute.xlu0 %943
        %v945 = vlaneseq
        %v946 = vshrl.u32 %v945, 7
        %v947 = vsub.s32 3, %v946
        %v948 = vrot.slane %v856, %v947
        %950 = vbcast.lane.b32.xlu0 %v948, 256
        %v951 = vpop.permute.xlu0 %950
        %s953 = sor.u32 256, 8
        %954 = vbcast.lane.b32.xlu0 %v948, %s953
        %v955 = vpop.permute.xlu0 %954
        %v956 = vadd.f32 %v904, %v918
        %v957 = vadd.f32 %v905, %v922
        %v958 = vadd.f32 %v906, %v929
        %v959 = vadd.f32 %v907, %v933
        %v960 = vadd.f32 %v908, %v940
        %v961 = vadd.f32 %v909, %v944
        %v962 = vadd.f32 %v910, %v951
        %v963 = vadd.f32 %v911, %v955
        %vm964 = vcmask 130048
        %965 = vst.msk [vmem:[%s323] sm:$0xff] %vm964, %v956
        %966 = vst.msk [vmem:[%s323 + $0x8] sm:$0xff] %vm964, %v957
        %967 = vst.msk [vmem:[%s323 + $0x10] sm:$0xff] %vm964, %v958
        %968 = vst.msk [vmem:[%s323 + $0x18] sm:$0xff] %vm964, %v959
        %969 = vst.msk [vmem:[%s323 + $0x20] sm:$0xff] %vm964, %v960
        %970 = vst.msk [vmem:[%s323 + $0x28] sm:$0xff] %vm964, %v961
        %971 = vst.msk [vmem:[%s323 + $0x30] sm:$0xff] %vm964, %v962
        %972 = vst.msk [vmem:[%s323 + $0x38] sm:$0xff] %vm964, %v963
        %s973 = sand.u32 %s222, 1
        %s974 = scalar_lea.sflag [#allocation5], %s973
        %s975 = sand.u32 %s222, 1
        %s976 = smul.addr %s975, 64
        %s977 = scalar_lea.vmem [#allocation4], %s976
        // Predicated region
        $region57: #{tpu_custom_call.1} parent=51 // pred_check
          %p978 = pneg %p232
        $region58: #{tpu_custom_call.1} parent=51 // pred_check_branch
          %980 = sbr.rel (%p978) target = $region60
        $region59: #{tpu_custom_call.1} parent=51 // pred_region
          %s981 = smul.u32 4, %s27
          %s983 = ssub.s32 1024, 1024
          %984 = vsyncadd %s974, %s983
          %s985 = smul.addr %s981, 2
          %s986 = smul.addr %s26, 16
          %s987 = sadd.s32 %s985, %s986
          %s988 = smul.addr %s987, 128
          %s989 = scalar_lea.hbm %s8, %s988
          %s990 = sshll.u32 %s977, 4
          %s991 = int_to_ptr.vmem [resolvable:$true] %s990
          %996 = dma.vmem_to_hbm [thread:$0]  %s991, 1024, %s989, %s974, 128, 128, 8
        $region60: #{tpu_custom_call.1} parent=51 // pred_fallthru
          _
      $region52: #{tpu_custom_call.1} parent=5 // pred_fallthru
        _
      %p997 = scmp.le.s32.totalorder 2, %s17
      // Predicated region
      $region61: #{tpu_custom_call.1} parent=5 // pred_check
        %p998 = pneg %p997
      $region62: #{tpu_custom_call.1} parent=5 // pred_check_branch
        %1000 = sbr.rel (%p998) target = $region64
      $region63: #{tpu_custom_call.1} parent=5 // pred_region
        %s1001 = ssub.s32 %s17, 2
        // Predicated region
        $region65: #{tpu_custom_call.1} parent=63 // pred_check
          %p1002 = pneg %p238
        $region66: #{tpu_custom_call.1} parent=63 // pred_check_branch
          %1004 = sbr.rel (%p1002) target = $region68
        $region67: #{tpu_custom_call.1} parent=63 // pred_region
          %s1005 = sand.u32 %s223, 1
          %s1006 = scalar_lea.sflag [#allocation5], %s1005
          %s1007 = sand.u32 %s223, 1
          %s1008 = smul.addr %s1007, 64
          %s1009 = scalar_lea.vmem [#allocation4], %s1008
          %1010 = dma.done %s1006, 1024
        $region68: #{tpu_custom_call.1} parent=63 // pred_fallthru
          _
      $region64: #{tpu_custom_call.1} parent=5 // pred_fallthru
        _
    $region6: #{tpu_custom_call.1} parent=1 // loop_footer
      %s21 = sadd.s32 1, %s17
    $region7: #{tpu_custom_call.1} parent=1 // loop_footer_branch
      %16 = sbr.rel target = $region3
    $region8: #{tpu_custom_call.1} parent=1 // loop_exit
      _
    %1011 = vsyncpa [#allocation5], 1
    %s1012 = scalar_lea.sflag [#allocation5], 1
    %1013 = vsyncpa %s1012, 1

</llo_original>
